<compile_context>
chip_gen: v5e
topology: v5e:2x2
jax: 0.10.0
libtpu: 0.0.40
codegen_flags: <defaults>
</compile_context>

<pallas_src>
import jax
import jax.numpy as jnp
from jax.experimental import pallas as pl
from jax.experimental.pallas import tpu as pltpu

# HBM->HBM path: target bytes per DMA block.  No VMEM is involved, so 8 MiB is
# safe on v5e/v6e/v7x and amortises per-grid-step overhead to ~1% everywhere.
_HBM_TARGET_BLOCK_BYTES = 8 * 1024 * 1024
# VMEM-staged path: input-block budget.  ~4x this (input + output, double
# buffered) stays well under v5e's 16 MiB scoped-VMEM default without flags.
_VMEM_TARGET_BLOCK_BYTES = 2 * 1024 * 1024
_VMEM_MAX_BLOCK_BYTES = 4 * 1024 * 1024
# Rows narrower than this make the strided HBM->HBM DMA descriptor-bound;
# stage full-width rows through VMEM and crop with vector ops instead.
_MIN_HBM_ROW_BYTES = 512
# Number of HBM->HBM copies kept in flight.
_K_INFLIGHT = 4


def _make_vmem_crop_kernel(pad: int, out_h: int, out_w: int):
    """Narrow-row path: full plane block in VMEM, crop via static slice."""

    def kernel(x_ref, o_ref):
        # x_ref: (ppb, H, W) VMEM block (contiguous full-width read).
        # o_ref: (ppb, out_h, out_w) VMEM block (auto write-back pipeline).
        # The slice is static -> cheap sublane/lane shift; no slot is saturated.
        o_ref[...] = x_ref[:, pad:pad + out_h, pad:pad + out_w]

    return kernel


def _make_hbm_crop_kernel(ppb: int, rem: int, n_blocks: int,
                          pad: int, out_h: int, out_w: int, k: int):
    """Wide-row path: one HBM->HBM DMA per block, k copies kept in flight."""
    exact = (rem == ppb)

    def kernel(x_hbm, o_hbm, sems):
        i = pl.program_id(0)

        def copy(base, nplanes, slot):
            src = x_hbm.at[pl.ds(base, nplanes),
                           pl.ds(pad, out_h),
                           pl.ds(pad, out_w)]
            dst = o_hbm.at[pl.ds(base, nplanes)]
            return pltpu.make_async_copy(src, dst, sems.at[slot])

        slot = i % k

        # Free this slot: wait for the copy issued k steps earlier.  That copy
        # is always a full-sized block (the only remainder block is the very
        # last grid step, which nothing waits on from "k steps later").
        @pl.when(i >= k)
        def _():
            copy(0, ppb, slot).wait()

        base = i * ppb
        if exact:
            copy(base, ppb, slot).start()
        else:
            @pl.when(i < n_blocks - 1)
            def _():
                copy(base, ppb, slot).start()

            @pl.when(i == n_blocks - 1)
            def _():
                copy(base, rem, slot).start()

        # Last grid step: drain every copy still in flight (all waits use
        # shape-matched dummy descriptors; only shapes/semaphore matter).
        @pl.when(i == n_blocks - 1)
        def _():
            n_outstanding = min(k, n_blocks)
            for j in range(n_blocks - n_outstanding, n_blocks):
                nplanes = rem if j == n_blocks - 1 else ppb
                copy(0, nplanes, j % k).wait()

    return kernel


def spatial_zero_padding(x, padding: int, *, block_bytes: int | None = None):
    """Equivalent of SpatialZeroPadding(padding).forward(x) for padding <= 0."""
    if padding > 0:
        # TODO(synk): positive padding (true zero-padding) is unimplemented in
        # the reference PyTorch module as well (it raises the same error).
        raise NotImplementedError("I don't know how to actually pad 0s")
    pad = -padding
    N, C, H, W = x.shape

    if pad == 0:
        # slice(-0, 0) == slice(0, 0): the reference module returns an empty crop.
        return x[:, :, 0:0, 0:0]

    out_h, out_w = H - 2 * pad, W - 2 * pad
    if out_h <= 0 or out_w <= 0:
        # Over-crop degenerates to an empty tensor, same as the PyTorch slice.
        return x[:, :, pad:H - pad, pad:W - pad]

    NC = N * C
    itemsize = jnp.dtype(x.dtype).itemsize
    x3 = x.reshape(NC, H, W)                   # collapse N, C (free, contiguous)

    out_bytes = NC * out_h * out_w * itemsize
    row_bytes = out_w * itemsize
    in_plane_bytes = H * W * itemsize          # narrow path reads full planes

    vmem_target = min(block_bytes or _VMEM_TARGET_BLOCK_BYTES,
                      _VMEM_MAX_BLOCK_BYTES)
    # Narrow rows -> stage through VMEM, unless a single full-width plane would
    # blow the VMEM budget, in which case the HBM->HBM path is always safe
    # (just descriptor-bound for tiny rows).
    use_vmem_path = (row_bytes < _MIN_HBM_ROW_BYTES
                     and in_plane_bytes <= vmem_target)

    if use_vmem_path:
        ppb = max(1, min(NC, vmem_target // in_plane_bytes))
        n_blocks = pl.cdiv(NC, ppb)            # partial last block is fine
        y3 = pl.pallas_call(
            _make_vmem_crop_kernel(pad, out_h, out_w),
            out_shape=jax.ShapeDtypeStruct((NC, out_h, out_w), x.dtype),
            grid_spec=pltpu.PrefetchScalarGridSpec(
                num_scalar_prefetch=0,
                grid=(n_blocks,),
                # Full-width, full-height plane block: fully contiguous reads,
                # auto double-buffered by the BlockSpec pipeline.
                in_specs=[pl.BlockSpec((ppb, H, W), lambda i: (i, 0, 0))],
                out_specs=pl.BlockSpec((ppb, out_h, out_w),
                                       lambda i: (i, 0, 0)),
            ),
            compiler_params=pltpu.CompilerParams(
                dimension_semantics=("parallel",),
            ),
            cost_estimate=pl.CostEstimate(
                flops=0, transcendentals=0,
                bytes_accessed=NC * in_plane_bytes + out_bytes,
            ),
        )(x3)
    else:
        hbm_target = block_bytes or _HBM_TARGET_BLOCK_BYTES
        crop_plane_bytes = out_h * out_w * itemsize
        ppb = max(1, min(NC, hbm_target // max(1, crop_plane_bytes)))
        n_blocks = pl.cdiv(NC, ppb)
        rem = NC - (n_blocks - 1) * ppb        # planes in the last block
        y3 = pl.pallas_call(
            _make_hbm_crop_kernel(ppb, rem, n_blocks, pad, out_h, out_w,
                                  _K_INFLIGHT),
            out_shape=jax.ShapeDtypeStruct((NC, out_h, out_w), x.dtype),
            grid_spec=pltpu.PrefetchScalarGridSpec(
                num_scalar_prefetch=0,
                grid=(n_blocks,),
                # Both operands stay in HBM; we DMA the cropped window directly.
                in_specs=[pl.BlockSpec(memory_space=pl.ANY)],
                out_specs=pl.BlockSpec(memory_space=pl.ANY),
                scratch_shapes=[pltpu.SemaphoreType.DMA((_K_INFLIGHT,))],
            ),
            compiler_params=pltpu.CompilerParams(
                # "arbitrary": the manual K-deep DMA pipeline (wait on the copy
                # from K steps ago) requires sequential grid execution.
                dimension_semantics=("arbitrary",),
                has_side_effects=True,
            ),
            cost_estimate=pl.CostEstimate(
                flops=0, transcendentals=0, bytes_accessed=2 * out_bytes
            ),
        )(x3)

    return y3.reshape(N, C, out_h, out_w)


if __name__ == "__main__":
    key = jax.random.PRNGKey(0)
    k1, k2, k3, k4, k5 = jax.random.split(key, 5)

    # 1) Primary check (narrow rows -> VMEM-staged path, single block).
    N, C, H, W = 2, 4, 16, 16
    padding = -2
    x = jax.random.normal(k1, (N, C, H, W), dtype=jnp.float32)
    y = jax.block_until_ready(spatial_zero_padding(x, padding))
    p = -padding
    assert y.shape == (N, C, H - 2 * p, W - 2 * p), y.shape
    assert jnp.array_equal(y, x[:, :, p:-p, p:-p]), "mismatch (primary)"

    # 2) Different shape / crop size (narrow path, odd dims).
    x2 = jax.random.normal(k2, (1, 3, 24, 20), jnp.float32)
    y2 = jax.block_until_ready(spatial_zero_padding(x2, -3))
    assert jnp.array_equal(y2, x2[:, :, 3:-3, 3:-3]), "mismatch (secondary)"

    # 3) Narrow path, forced small blocks: multi-step grid with a partial
    #    last plane-block (NC=15, ppb=2 -> 8 blocks, last one ragged).
    x3 = jax.random.normal(k3, (3, 5, 16, 16), jnp.float32)
    y3 = jax.block_until_ready(spatial_zero_padding(x3, -2, block_bytes=2048))
    assert jnp.array_equal(y3, x3[:, :, 2:-2, 2:-2]), "mismatch (narrow multi)"

    # 4) Wide rows (out_w*4 = 512 B) -> HBM->HBM path, single block, exact.
    x4 = jax.random.normal(k4, (2, 3, 16, 136), jnp.float32)
    y4 = jax.block_until_ready(spatial_zero_padding(x4, -4))
    assert jnp.array_equal(y4, x4[:, :, 4:-4, 4:-4]), "mismatch (wide single)"

    # 5) Wide rows, forced small blocks: NC=9, ppb=2 -> 5 blocks with a
    #    1-plane remainder; exercises the K=4 in-flight pipeline + drain.
    x5 = jax.random.normal(k5, (3, 3, 32, 160), jnp.float32)
    y5 = jax.block_until_ready(spatial_zero_padding(x5, -2, block_bytes=35000))
    assert jnp.array_equal(y5, x5[:, :, 2:-2, 2:-2]), "mismatch (wide multi)"

    # 6) Degenerate padding == 0 matches PyTorch slice(0, 0) -> empty spatial dims.
    y0 = spatial_zero_padding(x, 0)
    assert y0.shape == (N, C, 0, 0), y0.shape

    print("KERNEL_OK")
</pallas_src>

<mosaic_0001>
module attributes {stable_mosaic.version = 11 : i64} {
  func.func @kernel(%arg0: i32, %arg1: memref<8x16x16xf32, #tpu.memory_space<vmem>>, %arg2: memref<8x12x12xf32, #tpu.memory_space<vmem>>) attributes {dimension_semantics = [#tpu.dimension_semantics<parallel>], iteration_bounds = array<i64: 1>, scalar_prefetch = 0 : i64, scratch_operands = 0 : i64, tpu.core_type = #tpu.core_type<tc>, window_params = [{transform_indices = @transform_0, window_bounds = array<i64: 8, 16, 16>}, {transform_indices = @transform_1, window_bounds = array<i64: 8, 12, 12>}]} {
    %c0 = arith.constant 0 : index
    %c2 = arith.constant 2 : index
    %c2_0 = arith.constant 2 : index
    %0 = vector.load %arg1[%c0, %c2, %c2_0] : memref<8x16x16xf32, #tpu.memory_space<vmem>>, vector<8x12x12xf32>
    %c0_1 = arith.constant 0 : index
    %c0_2 = arith.constant 0 : index
    %c0_3 = arith.constant 0 : index
    %1 = vector.load %arg2[%c0_1, %c0_2, %c0_3] : memref<8x12x12xf32, #tpu.memory_space<vmem>>, vector<8x12x12xf32>
    tpu.vector_store %arg2[%c0_1, %c0_2, %c0_3], %0 {strides = array<i32>} : memref<8x12x12xf32, #tpu.memory_space<vmem>>, vector<8x12x12xf32>,
    return
  }
  func.func @transform_0(%arg0: i32) -> (i32, i32, i32) {
    %c0_i32 = arith.constant 0 : i32
    %c0_i32_0 = arith.constant 0 : i32
    %c0_i32_1 = arith.constant 0 : i32
    return %arg0, %c0_i32, %c0_i32_0 : i32, i32, i32
  }
  func.func @transform_1(%arg0: i32) -> (i32, i32, i32) {
    %c0_i32 = arith.constant 0 : i32
    %c0_i32_0 = arith.constant 0 : i32
    %c0_i32_1 = arith.constant 0 : i32
    return %arg0, %c0_i32, %c0_i32_0 : i32, i32, i32
  }
}

</mosaic_0001>

<llo_original>
// kernel: tpu_custom_call.1
$region0: #{tpu_custom_call.1}
  #allocation0 [shape = 'u32[]', space=smem, size = 0x4, offset = 0x4, fixed_abs, tag = 'smem constant byte address 0x4 - core index']
  #allocation1 [shape = 'u32[72,128]{1,0:T(1,128)}', space=vmem, size = 0x9000, scoped, tag = 'internal scratch']
  %s0 = inlined_call_operand.hbm [shape: f32[8,16,16], index: 0, kind: input, shape index: {}]
  %s1 = inlined_call_operand.vmem [shape: f32[8,12,12], index: 1, kind: output, shape index: {}]
  %s2 = sld [smem:[#allocation0]]
  $region18: #{tpu_custom_call.1} parent=0
    _
  %s4 = ssub.s32 1, %s2
  %s5 = scalar_select 0, %s4, %s2
  $region1: #{tpu_custom_call.1} parent=0
    #allocation2 [shape = 'u8[65536]{0}', space=vmem, size = 0x10000, scoped, tag = 'input window, operand 0, single buffered']
    #allocation3 [shape = 's32[1]{0}', space=sflag, size = 0x4, scoped, tag = 'scoped memory for tpu_custom_call.1']
    %6 = vsyncpa [#allocation3], 0
    // Predicated region
    $region2: #{tpu_custom_call.1} parent=1 // pred_check
      _
    $region3: #{tpu_custom_call.1} parent=1 // pred_check_branch
      %8 = sbr.rel (0) target = $region5
    $region4: #{tpu_custom_call.1} parent=1 // pred_region
      %10 = vsyncadd [#allocation3], 0
      %s11 = sshll.u32 %s0, 4
      %s12 = int_to_ptr.hbm [resolvable:$true] %s11
      %s13 = sshll.u32 [#allocation2], 4
      %s14 = int_to_ptr.vmem [resolvable:$true] %s13
      %19 = dma.hbm_to_vmem [thread:$0]  %s12, 2048, %s14, [#allocation3], 128, 128, 8
    $region5: #{tpu_custom_call.1} parent=1 // pred_fallthru
      _
    // Predicated region
    $region6: #{tpu_custom_call.1} parent=1 // pred_check
      _
    $region7: #{tpu_custom_call.1} parent=1 // pred_check_branch
      %21 = sbr.rel (0) target = $region9
    $region8: #{tpu_custom_call.1} parent=1 // pred_region
      %23 = dma.done [#allocation3], 2048
    $region9: #{tpu_custom_call.1} parent=1 // pred_fallthru
      _
    %v24 = vld [vmem:[#allocation2 + $0x2] sm:$0xff]
    %v25 = vld [vmem:[#allocation2 + $0xa] sm:$0xf]
    %v26 = vld [vmem:[#allocation2 + $0x12] sm:$0xff]
    %v27 = vld [vmem:[#allocation2 + $0x1a] sm:$0xf]
    %v28 = vld [vmem:[#allocation2 + $0x22] sm:$0xff]
    %v29 = vld [vmem:[#allocation2 + $0x2a] sm:$0xf]
    %v30 = vld [vmem:[#allocation2 + $0x32] sm:$0xff]
    %v31 = vld [vmem:[#allocation2 + $0x3a] sm:$0xf]
    %v32 = vld [vmem:[#allocation2 + $0x42] sm:$0xff]
    %v33 = vld [vmem:[#allocation2 + $0x4a] sm:$0xf]
    %v34 = vld [vmem:[#allocation2 + $0x52] sm:$0xff]
    %v35 = vld [vmem:[#allocation2 + $0x5a] sm:$0xf]
    %v36 = vld [vmem:[#allocation2 + $0x62] sm:$0xff]
    %v37 = vld [vmem:[#allocation2 + $0x6a] sm:$0xf]
    %v38 = vld [vmem:[#allocation2 + $0x72] sm:$0xff]
    %v39 = vld [vmem:[#allocation2 + $0x7a] sm:$0xf]
    %56 = vrot.lane.b32.xlu0 %v24, 126
    %v57 = vpop.permute.xlu0 %56
    %58 = vrot.lane.b32.xlu0 %v25, 126
    %v59 = vpop.permute.xlu0 %58
    %60 = vrot.lane.b32.xlu0 %v26, 126
    %v61 = vpop.permute.xlu0 %60
    %62 = vrot.lane.b32.xlu0 %v27, 126
    %v63 = vpop.permute.xlu0 %62
    %64 = vrot.lane.b32.xlu0 %v28, 126
    %v65 = vpop.permute.xlu0 %64
    %66 = vrot.lane.b32.xlu0 %v29, 126
    %v67 = vpop.permute.xlu0 %66
    %68 = vrot.lane.b32.xlu0 %v30, 126
    %v69 = vpop.permute.xlu0 %68
    %70 = vrot.lane.b32.xlu0 %v31, 126
    %v71 = vpop.permute.xlu0 %70
    %72 = vrot.lane.b32.xlu0 %v32, 126
    %v73 = vpop.permute.xlu0 %72
    %74 = vrot.lane.b32.xlu0 %v33, 126
    %v75 = vpop.permute.xlu0 %74
    %76 = vrot.lane.b32.xlu0 %v34, 126
    %v77 = vpop.permute.xlu0 %76
    %78 = vrot.lane.b32.xlu0 %v35, 126
    %v79 = vpop.permute.xlu0 %78
    %80 = vrot.lane.b32.xlu0 %v36, 126
    %v81 = vpop.permute.xlu0 %80
    %82 = vrot.lane.b32.xlu0 %v37, 126
    %v83 = vpop.permute.xlu0 %82
    %84 = vrot.lane.b32.xlu0 %v38, 126
    %v85 = vpop.permute.xlu0 %84
    %86 = vrot.lane.b32.xlu0 %v39, 126
    %v87 = vpop.permute.xlu0 %86
    %vm104 = vcmask 97280
    %105 = vst.msk [vmem:[%s1] sm:$0xff] %vm104, %v57
    %vm106 = vcmask 93184
    %107 = vst.msk [vmem:[%s1 + $0x8] sm:$0xf] %vm106, %v59
    %108 = vst.msk [vmem:[%s1 + $0x10] sm:$0xff] %vm104, %v61
    %109 = vst.msk [vmem:[%s1 + $0x18] sm:$0xf] %vm106, %v63
    %110 = vst.msk [vmem:[%s1 + $0x20] sm:$0xff] %vm104, %v65
    %111 = vst.msk [vmem:[%s1 + $0x28] sm:$0xf] %vm106, %v67
    %112 = vst.msk [vmem:[%s1 + $0x30] sm:$0xff] %vm104, %v69
    %113 = vst.msk [vmem:[%s1 + $0x38] sm:$0xf] %vm106, %v71
    %114 = vst.msk [vmem:[%s1 + $0x40] sm:$0xff] %vm104, %v73
    %115 = vst.msk [vmem:[%s1 + $0x48] sm:$0xf] %vm106, %v75
    %116 = vst.msk [vmem:[%s1 + $0x50] sm:$0xff] %vm104, %v77
    %117 = vst.msk [vmem:[%s1 + $0x58] sm:$0xf] %vm106, %v79
    %118 = vst.msk [vmem:[%s1 + $0x60] sm:$0xff] %vm104, %v81
    %119 = vst.msk [vmem:[%s1 + $0x68] sm:$0xf] %vm106, %v83
    %120 = vst.msk [vmem:[%s1 + $0x70] sm:$0xff] %vm104, %v85
    %121 = vst.msk [vmem:[%s1 + $0x78] sm:$0xf] %vm106, %v87
    // Predicated region
    $region10: #{tpu_custom_call.1} parent=1 // pred_check
      _
    $region11: #{tpu_custom_call.1} parent=1 // pred_check_branch
      %123 = sbr.rel (0) target = $region13
    $region12: #{tpu_custom_call.1} parent=1 // pred_region
      _
    $region13: #{tpu_custom_call.1} parent=1 // pred_fallthru
      _
    // Predicated region
    $region14: #{tpu_custom_call.1} parent=1 // pred_check
      _
    $region15: #{tpu_custom_call.1} parent=1 // pred_check_branch
      %125 = sbr.rel (0) target = $region17
    $region16: #{tpu_custom_call.1} parent=1 // pred_region
      _
    $region17: #{tpu_custom_call.1} parent=1 // pred_fallthru
      _
    %126 = vsyncpa [#allocation3], 1

</llo_original>
